<compile_context>
chip_gen: v5e
topology: v5e:2x2
jax: 0.10.0
libtpu: 0.0.40
codegen_flags: <defaults>
</compile_context>

<pallas_src>
import functools

import jax
import jax.numpy as jnp
from jax import lax
from jax.experimental import pallas as pl
from jax.experimental.pallas import tpu as pltpu


# ----------------------------------------------------------------------------
# Tiling / generation-aware budgeting helpers
# ----------------------------------------------------------------------------
_DMA_TARGET_BYTES = 8 * 1024 * 1024   # x1+x2 bytes per grid step


def _round_up(x, m):
    return ((x + m - 1) // m) * m


def _device_kind():
    try:
        return jax.devices()[0].device_kind.lower()
    except Exception:
        return ""


def _is_v7(kind):
    return ("v7" in kind) or ("7x" in kind)


def _vmem_limit_bytes(kind):
    # v7x: 64 MiB VMEM per TensorCore -> conservative 48 MiB scoped limit.
    # v5e / v6e: 128 MiB physical      -> 100 MiB scoped limit.
    return (48 if _is_v7(kind) else 100) * 1024 * 1024


def _num_core_slices(kind):
    # v7x has 2 TensorCores per chip; split the row reduction across them.
    return 2 if _is_v7(kind) else 1


def _choose_row_tile(n, d, itemsize, vmem_limit, granule):
    """Pick the row tile: ~8 MiB of x DMA per step, within a VMEM budget."""
    itemsize = max(int(itemsize), 2)
    d_pad = _round_up(d, 128)          # VMEM tiles are lane-padded to 128
    # Per-row VMEM cost of one grid step:
    #   * x1/x2 streams: 2 arrays x 2 pipeline buffers x d_pad lanes
    #   * y stream:      2 buffers x 128 lanes x 4 B (last-dim-1 is lane padded)
    #   * f32 widened tiles / products:  ~2 x d_pad x 4
    #   * narrow (row, 1) temporaries (dot/s1/s2/cos/terms): ~6 x 128 x 4
    per_row = (2 * 2 * d_pad * itemsize) + (2 * 128 * 4) \
              + (2 * d_pad * 4) + (6 * 128 * 4)
    budget = int(vmem_limit * 0.7)      # leave headroom for Mosaic internals
    vmem_cap = max(granule, (budget // per_row) // granule * granule)
    # DMA sizing: ~8 MiB of x1+x2 bytes per grid step keeps the ~0.35 us
    # per-step pipeline overhead small relative to each step's HBM time.
    dma_rows = max(granule,
                   (_DMA_TARGET_BYTES // (2 * d * itemsize)) // granule * granule)
    row_tile = min(vmem_cap, dma_rows, _round_up(n, granule))
    return int(max(granule, row_tile))


# ----------------------------------------------------------------------------
# Pallas kernel: coscos2 loss
#   cos    = <x1, x2> / (max(||x1||, eps) * max(||x2||, eps))     (eps = 1e-8)
#   loss_i = (1 - cos_i)/2   if y_i == +1
#          = cos_i^2         if y_i == -1
#   loss   = mean(loss_i) if avg else sum(loss_i)      (labels are {+1, -1})
# ----------------------------------------------------------------------------
def _coscos2_kernel(x1_ref, x2_ref, y_ref, out_ref, acc_ref, *,
                    row_tile, steps_per_slice, n_rows, keep_bf16):
    c = pl.program_id(0)      # core slice (parallel)
    i = pl.program_id(1)      # row-block step within the slice (reduction)

    @pl.when(i == 0)
    def _init():
        acc_ref[...] = jnp.zeros_like(acc_ref)

    if keep_bf16:
        # v6e/v7x: native bf16 VPU -> keep the elementwise products in bf16
        # and widen only the reduced per-row partials to f32.
        x1 = x1_ref[...]                                        # (row_tile, D) bf16
        x2 = x2_ref[...]
        dot = jnp.sum((x1 * x2).astype(jnp.float32), axis=1, keepdims=True)
        s1 = jnp.sum((x1 * x1).astype(jnp.float32), axis=1, keepdims=True)
        s2 = jnp.sum((x2 * x2).astype(jnp.float32), axis=1, keepdims=True)
    else:
        x1 = x1_ref[...].astype(jnp.float32)                    # (row_tile, D)
        x2 = x2_ref[...].astype(jnp.float32)
        dot = jnp.sum(x1 * x2, axis=1, keepdims=True)           # (row_tile, 1)
        s1 = jnp.sum(x1 * x1, axis=1, keepdims=True)
        s2 = jnp.sum(x2 * x2, axis=1, keepdims=True)

    # eps folded into the squared norms; one EUP rsqrt, no sqrt/divide on VPU.
    eps2 = jnp.float32(1e-8 * 1e-8)
    cos = dot * lax.rsqrt(jnp.maximum(s1, eps2) * jnp.maximum(s2, eps2))

    # Labels: streamed (row_tile, 1) block, same index map as x1/x2.
    # {+1,-1} contract -> single select.  (Note: any label <= 0 is treated as a
    # negative pair; labels outside {+1,-1} deviate from the torch reference.)
    y = y_ref[...].astype(jnp.float32)                          # (row_tile, 1)
    terms = jnp.where(y > 0, 0.5 * (1.0 - cos), cos * cos)

    # Mask rows past N (partial last block / padding blocks of the core split).
    block = c * steps_per_slice + i
    row0 = block * row_tile
    local = lax.broadcasted_iota(jnp.int32, (row_tile, 1), 0)
    terms = jnp.where(local + row0 < n_rows, terms, 0.0)

    # Scalar accumulator: the (row_tile, 1) -> scalar reduce uses the idle XLU;
    # only one vld/vadd/vst on the accumulator per step.
    acc_ref[...] += jnp.sum(terms)

    @pl.when(i == pl.num_programs(1) - 1)
    def _finalize():
        out_ref[...] = acc_ref[...].reshape(out_ref.shape)


def coscos2_pallas(x1, x2, y, *, avg=True, row_tile=None, num_slices=None):
    """coscos2 loss via a Pallas TPU kernel.

    x1, x2: (N, D) embeddings; y: (N,) or (N, 1) labels in {+1, -1}.
    """
    assert x1.shape == x2.shape, "Input not the same size"
    n, d = x1.shape

    kind = _device_kind()
    vmem_limit = _vmem_limit_bytes(kind)

    in_dtype = jnp.dtype(x1.dtype)
    # bf16 fast path only on generations with a bf16 VPU (v6e / v7x).
    keep_bf16 = (in_dtype == jnp.bfloat16) and (("v6" in kind) or _is_v7(kind))

    # Sublane granularity for the row tile (8 for 32-bit, 16 for 16-bit, ...).
    granule = max(8, 32 // max(int(in_dtype.itemsize), 1))

    if row_tile is None:
        row_tile = _choose_row_tile(n, d, in_dtype.itemsize, vmem_limit, granule)
    else:
        row_tile = max(granule, _round_up(int(row_tile), granule))

    total_blocks = int(pl.cdiv(n, row_tile))
    want_slices = _num_core_slices(kind) if num_slices is None else int(num_slices)
    num_slices = max(1, min(want_slices, total_blocks))
    steps = int(pl.cdiv(total_blocks, num_slices))

    y2d = jnp.asarray(y).astype(jnp.float32).reshape(n, 1)

    if num_slices == 1:
        x_map = lambda c, i: (i, 0)
    else:
        # Clamp so padding steps of the last slice re-read a valid block; their
        # rows are masked out inside the kernel, so nothing is double counted.
        x_map = lambda c, i: (jnp.minimum(c * steps + i, total_blocks - 1), 0)

    kernel = functools.partial(
        _coscos2_kernel, row_tile=row_tile, steps_per_slice=steps,
        n_rows=n, keep_bf16=keep_bf16)

    partials = pl.pallas_call(
        kernel,
        # 3-D partials so the last two block dims equal the full array dims
        # (valid tiling even with num_slices == 2).
        out_shape=jax.ShapeDtypeStruct((num_slices, 1, 1), jnp.float32),
        grid_spec=pltpu.PrefetchScalarGridSpec(
            num_scalar_prefetch=0,
            grid=(num_slices, steps),
            in_specs=[
                pl.BlockSpec((row_tile, d), x_map),
                pl.BlockSpec((row_tile, d), x_map),
                pl.BlockSpec((row_tile, 1), x_map),     # streamed labels
            ],
            out_specs=pl.BlockSpec((1, 1, 1), lambda c, i: (c, 0, 0)),
            scratch_shapes=[pltpu.VMEM((1, 1), jnp.float32)],
        ),
        compiler_params=pltpu.CompilerParams(
            dimension_semantics=("parallel", "arbitrary"),
            vmem_limit_bytes=vmem_limit,
        ),
    )(x1, x2, y2d)

    total = jnp.sum(partials)
    if avg:
        # Under the {+1,-1} label contract the pair count is exactly N.
        return total / jnp.float32(n)
    return total


# ----------------------------------------------------------------------------
# JAX mirror of the PyTorch class hierarchy
# ----------------------------------------------------------------------------
class LossBuilder:
    """Generic Loss class for ABnet3 (JAX/Pallas port)."""

    def forward(self, *args, **kwargs):
        # Exact semantics of the PyTorch base class: abstract forward.
        raise NotImplementedError('Unimplemented forward for class:',
                                  self.__class__.__name__)

    def __call__(self, *args, **kwargs):
        return self.forward(*args, **kwargs)

    def whoami(self, *args, **kwargs):
        return {'params': self.__dict__, 'class_name': self.__class__.__name__}


class CosCos2Loss(LossBuilder):
    """Canonical concrete ABnet3 loss (coscos2) with a Pallas TPU forward."""

    def __init__(self, avg=True):
        self.avg = avg

    def forward(self, input1, input2, y):
        return coscos2_pallas(input1, input2, y, avg=self.avg)


def _coscos2_reference(x1, x2, y, avg=True):
    eps = 1e-8
    x1 = x1.astype(jnp.float32)
    x2 = x2.astype(jnp.float32)
    dot = jnp.sum(x1 * x2, axis=1)
    n1 = jnp.maximum(jnp.linalg.norm(x1, axis=1), eps)
    n2 = jnp.maximum(jnp.linalg.norm(x2, axis=1), eps)
    cos = dot / (n1 * n2)
    pos = (y == 1.0)
    neg = (y == -1.0)
    terms = jnp.where(pos, (1.0 - cos) / 2.0, 0.0) + jnp.where(neg, cos ** 2, 0.0)
    total = jnp.sum(terms)
    count = jnp.sum(pos.astype(jnp.float32) + neg.astype(jnp.float32))
    return total / count if avg else total


if __name__ == "__main__":
    key = jax.random.PRNGKey(0)
    k1, k2, k3, k4, k5, k6, k7, k8, k9 = jax.random.split(key, 9)

    # Base class stays abstract, as in PyTorch.
    base = LossBuilder()
    assert 'class_name' in base.whoami()
    try:
        base.forward(None, None, None)
        raise AssertionError("base forward should have raised")
    except NotImplementedError:
        pass

    # --- test 1: small demo shapes, auto row tile --------------------------
    N, D = 16, 32
    x1 = jax.random.normal(k1, (N, D), dtype=jnp.float32)
    x2 = jax.random.normal(k2, (N, D), dtype=jnp.float32)
    y = jnp.where(jax.random.bernoulli(k3, 0.5, (N,)), 1.0, -1.0).astype(jnp.float32)

    loss_fn = CosCos2Loss(avg=True)
    loss = loss_fn(x1, x2, y)
    jax.block_until_ready(loss)
    ref = _coscos2_reference(x1, x2, y, avg=True)
    assert jnp.allclose(loss, ref, rtol=1e-4, atol=1e-5), (loss, ref)

    # --- test 2: N not divisible by the tile, forced multi-block grid ------
    N2, D2 = 20, 32
    a1 = jax.random.normal(k4, (N2, D2), dtype=jnp.float32)
    a2 = jax.random.normal(k5, (N2, D2), dtype=jnp.float32)
    y2 = jnp.where(jax.random.bernoulli(k6, 0.5, (N2,)), 1.0, -1.0).astype(jnp.float32)

    loss2 = coscos2_pallas(a1, a2, y2, avg=False, row_tile=8)
    jax.block_until_ready(loss2)
    ref2 = _coscos2_reference(a1, a2, y2, avg=False)
    assert jnp.allclose(loss2, ref2, rtol=1e-4, atol=1e-5), (loss2, ref2)

    loss3 = coscos2_pallas(a1, a2, y2, avg=True, row_tile=8)
    jax.block_until_ready(loss3)
    ref3 = _coscos2_reference(a1, a2, y2, avg=True)
    assert jnp.allclose(loss3, ref3, rtol=1e-4, atol=1e-5), (loss3, ref3)

    # --- test 3: force the 2-slice (v7x-style) grid on any generation ------
    loss4 = coscos2_pallas(a1, a2, y2, avg=False, row_tile=8, num_slices=2)
    jax.block_until_ready(loss4)
    assert jnp.allclose(loss4, ref2, rtol=1e-4, atol=1e-5), (loss4, ref2)

    # --- test 4: bf16 inputs (bf16 product path on v6e/v7x, widen elsewhere)
    N3, D3 = 64, 64
    b1 = jax.random.normal(k7, (N3, D3), dtype=jnp.float32).astype(jnp.bfloat16)
    b2 = jax.random.normal(k8, (N3, D3), dtype=jnp.float32).astype(jnp.bfloat16)
    y3 = jnp.where(jax.random.bernoulli(k9, 0.5, (N3,)), 1.0, -1.0).astype(jnp.float32)

    loss5 = coscos2_pallas(b1, b2, y3, avg=True)
    jax.block_until_ready(loss5)
    ref5 = _coscos2_reference(b1.astype(jnp.float32), b2.astype(jnp.float32), y3, avg=True)
    assert jnp.allclose(loss5, ref5, rtol=3e-2, atol=3e-2), (loss5, ref5)

    print("KERNEL_OK")
</pallas_src>

<mosaic_0001>
module attributes {stable_mosaic.version = 11 : i64} {
  func.func @_coscos2_kernel(%arg0: i32, %arg1: i32, %arg2: memref<16x32xf32, #tpu.memory_space<vmem>>, %arg3: memref<16x32xf32, #tpu.memory_space<vmem>>, %arg4: memref<16x1xf32, #tpu.memory_space<vmem>>, %arg5: memref<1x1x1xf32, #tpu.memory_space<vmem>>, %arg6: memref<1x1xf32, #tpu.memory_space<vmem>>) attributes {dimension_semantics = [#tpu.dimension_semantics<parallel>, #tpu.dimension_semantics<arbitrary>], iteration_bounds = array<i64: 1, 1>, scalar_prefetch = 0 : i64, scratch_operands = 1 : i64, tpu.core_type = #tpu.core_type<tc>, window_params = [{transform_indices = @transform_0, window_bounds = array<i64: 16, 32>}, {transform_indices = @transform_1, window_bounds = array<i64: 16, 32>}, {transform_indices = @transform_2, window_bounds = array<i64: 16, 1>}, {transform_indices = @transform_3, window_bounds = array<i64: 1, 1, 1>}]} {
    %c0_i32 = arith.constant 0 : i32
    %0 = arith.cmpi eq, %arg1, %c0_i32 : i32
    %1 = arith.extui %0 : i1 to i32
    %c0_i32_0 = arith.constant 0 : i32
    %2 = arith.cmpi ne, %1, %c0_i32_0 : i32
    scf.if %2 {
      %cst_22 = arith.constant 0.000000e+00 : f32
      %51 = vector.broadcast %cst_22 : f32 to vector<1x1xf32>
      %c0_23 = arith.constant 0 : index
      %c0_24 = arith.constant 0 : index
      %52 = vector.load %arg6[%c0_23, %c0_24] : memref<1x1xf32, #tpu.memory_space<vmem>>, vector<1x1xf32>
      tpu.vector_store %arg6[%c0_23, %c0_24], %51 {strides = array<i32>} : memref<1x1xf32, #tpu.memory_space<vmem>>, vector<1x1xf32>,
    } else {
    }
    %c0 = arith.constant 0 : index
    %c0_1 = arith.constant 0 : index
    %3 = vector.load %arg2[%c0, %c0_1] : memref<16x32xf32, #tpu.memory_space<vmem>>, vector<16x32xf32>
    %c0_2 = arith.constant 0 : index
    %c0_3 = arith.constant 0 : index
    %4 = vector.load %arg3[%c0_2, %c0_3] : memref<16x32xf32, #tpu.memory_space<vmem>>, vector<16x32xf32>
    %5 = arith.mulf %3, %4 : vector<16x32xf32>
    %cst = arith.constant dense<0.000000e+00> : vector<16xf32>
    %6 = vector.multi_reduction <add>, %5, %cst [1] : vector<16x32xf32> to vector<16xf32>
    %7 = vector.shape_cast %6 : vector<16xf32> to vector<16x1xf32>
    %8 = arith.mulf %3, %3 : vector<16x32xf32>
    %cst_4 = arith.constant dense<0.000000e+00> : vector<16xf32>
    %9 = vector.multi_reduction <add>, %8, %cst_4 [1] : vector<16x32xf32> to vector<16xf32>
    %10 = vector.shape_cast %9 : vector<16xf32> to vector<16x1xf32>
    %11 = arith.mulf %4, %4 : vector<16x32xf32>
    %cst_5 = arith.constant dense<0.000000e+00> : vector<16xf32>
    %12 = vector.multi_reduction <add>, %11, %cst_5 [1] : vector<16x32xf32> to vector<16xf32>
    %13 = vector.shape_cast %12 : vector<16xf32> to vector<16x1xf32>
    %cst_6 = arith.constant 1.000000e-16 : f32
    %14 = vector.broadcast %cst_6 : f32 to vector<16x1xf32>
    %15 = arith.maximumf %10, %14 : vector<16x1xf32>
    %cst_7 = arith.constant 1.000000e-16 : f32
    %16 = vector.broadcast %cst_7 : f32 to vector<16x1xf32>
    %17 = arith.maximumf %13, %16 : vector<16x1xf32>
    %18 = arith.mulf %15, %17 : vector<16x1xf32>
    %19 = math.rsqrt %18 : vector<16x1xf32>
    %20 = arith.mulf %7, %19 : vector<16x1xf32>
    %c0_8 = arith.constant 0 : index
    %c0_9 = arith.constant 0 : index
    %21 = vector.load %arg4[%c0_8, %c0_9] : memref<16x1xf32, #tpu.memory_space<vmem>>, vector<16x1xf32>
    %cst_10 = arith.constant 0.000000e+00 : f32
    %22 = vector.broadcast %cst_10 : f32 to vector<16x1xf32>
    %23 = arith.cmpf ogt, %21, %22 : vector<16x1xf32>
    %cst_11 = arith.constant 1.000000e+00 : f32
    %24 = vector.broadcast %cst_11 : f32 to vector<16x1xf32>
    %25 = arith.subf %24, %20 : vector<16x1xf32>
    %cst_12 = arith.constant 5.000000e-01 : f32
    %26 = vector.broadcast %cst_12 : f32 to vector<16x1xf32>
    %27 = arith.mulf %26, %25 : vector<16x1xf32>
    %28 = arith.mulf %20, %20 : vector<16x1xf32>
    %29 = arith.select %23, %27, %28 : vector<16x1xi1>, vector<16x1xf32>
    %c1_i32 = arith.constant 1 : i32
    %30 = arith.muli %arg0, %c1_i32 : i32
    %31 = arith.addi %30, %arg1 : i32
    %c16_i32 = arith.constant 16 : i32
    %32 = arith.muli %31, %c16_i32 : i32
    %33 = tpu.iota {dimensions = array<i32: 0>} : vector<16x1xi32>
    %34 = vector.broadcast %32 : i32 to vector<16x1xi32>
    %35 = arith.addi %33, %34 : vector<16x1xi32>
    %c16_i32_13 = arith.constant 16 : i32
    %36 = vector.broadcast %c16_i32_13 : i32 to vector<16x1xi32>
    %37 = arith.cmpi slt, %35, %36 : vector<16x1xi32>
    %cst_14 = arith.constant 0.000000e+00 : f32
    %38 = vector.broadcast %cst_14 : f32 to vector<16x1xf32>
    %39 = arith.select %37, %29, %38 : vector<16x1xi1>, vector<16x1xf32>
    %c0_15 = arith.constant 0 : index
    %c0_16 = arith.constant 0 : index
    %40 = vector.load %arg6[%c0_15, %c0_16] : memref<1x1xf32, #tpu.memory_space<vmem>>, vector<1x1xf32>
    %41 = vector.shape_cast %39 : vector<16x1xf32> to vector<1x16x1xf32>
    %cst_17 = arith.constant dense<0.000000e+00> : vector<1xf32>
    %42 = vector.multi_reduction <add>, %41, %cst_17 [1, 2] : vector<1x16x1xf32> to vector<1xf32>
    %43 = vector.shape_cast %42 : vector<1xf32> to vector<1x1x1xf32>
    %44 = vector.extract %43[0, 0, 0] : f32 from vector<1x1x1xf32>
    %45 = vector.broadcast %44 : f32 to vector<1x1xf32>
    %46 = arith.addf %40, %45 : vector<1x1xf32>
    %c0_18 = arith.constant 0 : index
    %c0_19 = arith.constant 0 : index
    %47 = vector.load %arg6[%c0_18, %c0_19] : memref<1x1xf32, #tpu.memory_space<vmem>>, vector<1x1xf32>
    tpu.vector_store %arg6[%c0_18, %c0_19], %46 {strides = array<i32>} : memref<1x1xf32, #tpu.memory_space<vmem>>, vector<1x1xf32>,
    %c0_i32_20 = arith.constant 0 : i32
    %48 = arith.cmpi eq, %arg1, %c0_i32_20 : i32
    %49 = arith.extui %48 : i1 to i32
    %c0_i32_21 = arith.constant 0 : i32
    %50 = arith.cmpi ne, %49, %c0_i32_21 : i32
    scf.if %50 {
      %c0_22 = arith.constant 0 : index
      %c0_23 = arith.constant 0 : index
      %51 = vector.load %arg6[%c0_22, %c0_23] : memref<1x1xf32, #tpu.memory_space<vmem>>, vector<1x1xf32>
      %52 = vector.shape_cast %51 : vector<1x1xf32> to vector<1x1x1xf32>
      %c0_24 = arith.constant 0 : index
      %c0_25 = arith.constant 0 : index
      %c0_26 = arith.constant 0 : index
      %53 = vector.load %arg5[%c0_24, %c0_25, %c0_26] : memref<1x1x1xf32, #tpu.memory_space<vmem>>, vector<1x1x1xf32>
      tpu.vector_store %arg5[%c0_24, %c0_25, %c0_26], %52 {strides = array<i32>} : memref<1x1x1xf32, #tpu.memory_space<vmem>>, vector<1x1x1xf32>,
    } else {
    }
    return
  }
  func.func @transform_0(%arg0: i32, %arg1: i32) -> (i32, i32) {
    %c0_i32 = arith.constant 0 : i32
    %c0_i32_0 = arith.constant 0 : i32
    return %arg1, %c0_i32 : i32, i32
  }
  func.func @transform_1(%arg0: i32, %arg1: i32) -> (i32, i32) {
    %c0_i32 = arith.constant 0 : i32
    %c0_i32_0 = arith.constant 0 : i32
    return %arg1, %c0_i32 : i32, i32
  }
  func.func @transform_2(%arg0: i32, %arg1: i32) -> (i32, i32) {
    %c0_i32 = arith.constant 0 : i32
    %c0_i32_0 = arith.constant 0 : i32
    return %arg1, %c0_i32 : i32, i32
  }
  func.func @transform_3(%arg0: i32, %arg1: i32) -> (i32, i32, i32) {
    %c0_i32 = arith.constant 0 : i32
    %c0_i32_0 = arith.constant 0 : i32
    %c0_i32_1 = arith.constant 0 : i32
    return %arg0, %c0_i32, %c0_i32_0 : i32, i32, i32
  }
}

</mosaic_0001>

<llo_original>
// kernel: tpu_custom_call.1
$region0: #{tpu_custom_call.1}
  #allocation0 [shape = 'u32[]', space=smem, size = 0x4, offset = 0x4, fixed_abs, tag = 'smem constant byte address 0x4 - core index']
  #allocation1 [shape = 'u32[72,128]{1,0:T(1,128)}', space=vmem, size = 0x9000, scoped, tag = 'internal scratch']
  #allocation2 [shape = 'f32[1,1]{1,0:T(1,128)}', space=vmem, size = 0x200, scoped, tag = 'scratch operand']
  %s0 = inlined_call_operand.vmem [shape: f32[16,32], index: 0, kind: input, shape index: {}]
  %s1 = inlined_call_operand.hbm [shape: f32[16,32], index: 1, kind: input, shape index: {}]
  %s2 = inlined_call_operand.vmem [shape: f32[16,1], index: 2, kind: input, shape index: {}]
  %s3 = inlined_call_operand.hbm [shape: f32[1,1,1], index: 3, kind: output, shape index: {}]
  %s4 = sld [smem:[#allocation0]]
  $region34: #{tpu_custom_call.1} parent=0
    _
  %s6 = ssub.s32 1, %s4
  %s7 = scalar_select 0, %s6, %s4
  $region1: #{tpu_custom_call.1} parent=0
    #allocation3 [shape = 'u8[8192]{0}', space=vmem, size = 0x2000, scoped, tag = 'input window, operand 1, single buffered']
    #allocation4 [shape = 's32[1]{0}', space=sflag, size = 0x4, scoped, tag = 'scoped memory for tpu_custom_call.1']
    #allocation5 [shape = 's32[1]{0}', space=sflag, size = 0x4, scoped, tag = 'scoped memory for tpu_custom_call.1']
    #allocation6 [shape = 'u8[512]{0}', space=vmem, size = 0x400, scoped, tag = 'output window, operand 0, single buffered']
    %8 = vsyncpa [#allocation4], 0
    %9 = vsyncpa [#allocation5], 0
    // Predicated region
    $region2: #{tpu_custom_call.1} parent=1 // pred_check
      _
    $region3: #{tpu_custom_call.1} parent=1 // pred_check_branch
      %11 = sbr.rel (0) target = $region5
    $region4: #{tpu_custom_call.1} parent=1 // pred_region
      _
    $region5: #{tpu_custom_call.1} parent=1 // pred_fallthru
      _
    // Predicated region
    $region6: #{tpu_custom_call.1} parent=1 // pred_check
      _
    $region7: #{tpu_custom_call.1} parent=1 // pred_check_branch
      %13 = sbr.rel (0) target = $region9
    $region8: #{tpu_custom_call.1} parent=1 // pred_region
      %15 = vsyncadd [#allocation4], 0
      %s16 = sshll.u32 %s1, 4
      %s17 = int_to_ptr.hbm [resolvable:$true] %s16
      %s18 = sshll.u32 [#allocation3], 4
      %s19 = int_to_ptr.vmem [resolvable:$true] %s18
      %24 = dma.hbm_to_vmem [thread:$0]  %s17, 256, %s19, [#allocation4], 128, 128, 8
    $region9: #{tpu_custom_call.1} parent=1 // pred_fallthru
      _
    // Predicated region
    $region10: #{tpu_custom_call.1} parent=1 // pred_check
      _
    $region11: #{tpu_custom_call.1} parent=1 // pred_check_branch
      %26 = sbr.rel (0) target = $region13
    $region12: #{tpu_custom_call.1} parent=1 // pred_region
      _
    $region13: #{tpu_custom_call.1} parent=1 // pred_fallthru
      _
    // Predicated region
    $region14: #{tpu_custom_call.1} parent=1 // pred_check
      _
    $region15: #{tpu_custom_call.1} parent=1 // pred_check_branch
      %28 = sbr.rel (0) target = $region17
    $region16: #{tpu_custom_call.1} parent=1 // pred_region
      %30 = dma.done [#allocation4], 256
    $region17: #{tpu_custom_call.1} parent=1 // pred_fallthru
      _
    %p31 = scmp.eq.s32.totalorder 0, 0
    // Predicated region
    $region18: #{tpu_custom_call.1} parent=1 // pred_check
      %p32 = pneg %p31
    $region19: #{tpu_custom_call.1} parent=1 // pred_check_branch
      %34 = sbr.rel (%p32) target = $region21
    $region20: #{tpu_custom_call.1} parent=1 // pred_region
      %vm35 = vcmask 0
      %36 = vst.msk [vmem:[#allocation2] sm:$0x1] %vm35, 0.0
    $region21: #{tpu_custom_call.1} parent=1 // pred_fallthru
      _
    %v37 = vld [vmem:[%s0] sm:$0xff]
    %v38 = vld [vmem:[%s0 + $0x8] sm:$0xff]
    %v39 = vld [vmem:[#allocation3] sm:$0xff]
    %v40 = vld [vmem:[#allocation3 + $0x8] sm:$0xff]
    %v41 = vmul.f32 %v37, %v39
    %v42 = vmul.f32 %v38, %v40
    %vm43 = vcmask 261120
    %v44 = vsel %vm43, %v41, 0.0
    %45 = vadd.xlane.f32.xlu0 %v44
    %v46 = vpop.xlane.xlu0 %45
    %v47 = vsel %vm43, %v42, 0.0
    %48 = vadd.xlane.f32.xlu0 %v47
    %v49 = vpop.xlane.xlu0 %48
    %v50 = vmul.f32 %v37, %v37
    %v51 = vmul.f32 %v38, %v38
    %v52 = vsel %vm43, %v50, 0.0
    %53 = vadd.xlane.f32.xlu0 %v52
    %v54 = vpop.xlane.xlu0 %53
    %v55 = vsel %vm43, %v51, 0.0
    %56 = vadd.xlane.f32.xlu0 %v55
    %v57 = vpop.xlane.xlu0 %56
    %v58 = vmul.f32 %v39, %v39
    %v59 = vmul.f32 %v40, %v40
    %v60 = vsel %vm43, %v58, 0.0
    %61 = vadd.xlane.f32.xlu0 %v60
    %v62 = vpop.xlane.xlu0 %61
    %v63 = vsel %vm43, %v59, 0.0
    %64 = vadd.xlane.f32.xlu0 %v63
    %v65 = vpop.xlane.xlu0 %64
    %v66 = vmax.f32 %v54, 1e-16
    %v67 = vmax.f32 %v57, 1e-16
    %v68 = vmax.f32 %v62, 1e-16
    %v69 = vmax.f32 %v65, 1e-16
    %v70 = vmul.f32 %v66, %v68
    %v71 = vmul.f32 %v67, %v69
    %v72 = vrsqrt.pop %v70
    %v73 = vmul.f32 %v72, %v70
    %v74 = vmul.f32 %v73, %v72
    %v75 = vmul.f32 0.5, %v74
    %v76 = vsub.f32 1.5, %v75
    %v77 = vmul.f32 %v72, %v76
    %vm78 = vweird.f32 %v70
    %vm79 = vweird.f32 %v72
    %vm80 = vmor %vm78, %vm79
    %v81 = vsel %vm80, %v72, %v77
    %v82 = vrsqrt.pop %v71
    %v83 = vmul.f32 %v82, %v71
    %v84 = vmul.f32 %v83, %v82
    %v85 = vmul.f32 0.5, %v84
    %v86 = vsub.f32 1.5, %v85
    %v87 = vmul.f32 %v82, %v86
    %vm88 = vweird.f32 %v71
    %vm89 = vweird.f32 %v82
    %vm90 = vmor %vm88, %vm89
    %v91 = vsel %vm90, %v82, %v87
    %v92 = vmul.f32 %v46, %v81
    %v93 = vmul.f32 %v49, %v91
    %v94 = vld [vmem:[%s2] sm:$0xff]
    %v95 = vld [vmem:[%s2 + $0x8] sm:$0xff]
    %vm96 = vcmp.gt.f32.partialorder %v94, 0.0
    %vm97 = vcmp.gt.f32.partialorder %v95, 0.0
    %v98 = vsub.f32 1.0, %v92
    %v99 = vsub.f32 1.0, %v93
    %v100 = vmul.f32 %v98, 0.5
    %v101 = vmul.f32 %v99, 0.5
    %v102 = vmul.f32 %v92, %v92
    %v103 = vmul.f32 %v93, %v93
    %v104 = vsel %vm96, %v100, %v102
    %v105 = vsel %vm97, %v101, %v103
    %s106 = sadd.s32 0, 0
    %s107 = smul.u32 %s106, 16
    %v108 = vlaneseq
    %v109 = vshrl.u32 %v108, 7
    %v110 = vadd.s32 %v109, 8
    %v111 = vstv %s107
    %v112 = vadd.s32 %v109, %v111
    %v113 = vadd.s32 %v110, %v111
    %vm114 = vcmp.lt.s32.totalorder %v112, 16
    %vm115 = vcmp.lt.s32.totalorder %v113, 16
    %v116 = vsel %vm114, %v104, 0.0
    %v117 = vsel %vm115, %v105, 0.0
    %v118 = vld [vmem:[#allocation2] sm:$0x1]
    %vm119 = vcmask 7168
    %v120 = vsel %vm119, %v116, 0.0
    %v121 = vsel %vm119, %v117, 0.0
    %v122 = vadd.f32 %v120, %v121
    %123 = vadd.xlane.f32.xlu0 %v122
    %v124 = vpop.xlane.xlu0 %123
    %v125 = vrot.slane %v124, 4
    %v126 = vadd.f32 %v124, %v125
    %v127 = vrot.slane %v126, 2
    %v128 = vadd.f32 %v126, %v127
    %v129 = vrot.slane %v128, 1
    %v130 = vadd.f32 %v128, %v129
    %s131 = vtos %v130
    %v132 = vstv %s131
    %v133 = vadd.f32 %v118, %v132
    %vm134 = vcmask 0
    %135 = vst.msk [vmem:[#allocation2] sm:$0x1] %vm134, %v133
    // Predicated region
    $region22: #{tpu_custom_call.1} parent=1 // pred_check
      %p136 = pneg %p31
    $region23: #{tpu_custom_call.1} parent=1 // pred_check_branch
      %138 = sbr.rel (%p136) target = $region25
    $region24: #{tpu_custom_call.1} parent=1 // pred_region
      %v139 = vld [vmem:[#allocation2] sm:$0x1]
      %140 = vst.msk [vmem:[#allocation6] sm:$0x1] %vm134, %v139
    $region25: #{tpu_custom_call.1} parent=1 // pred_fallthru
      _
    // Predicated region
    $region26: #{tpu_custom_call.1} parent=1 // pred_check
      _
    $region27: #{tpu_custom_call.1} parent=1 // pred_check_branch
      %142 = sbr.rel (0) target = $region29
    $region28: #{tpu_custom_call.1} parent=1 // pred_region
      %144 = vsyncadd [#allocation5], 0
      %s146 = sshll.u32 [#allocation6], 4
      %s147 = int_to_ptr.vmem [resolvable:$true] %s146
      %s148 = sshll.u32 %s3, 4
      %s149 = int_to_ptr.hbm [resolvable:$true] %s148
      %151 = dma.vmem_to_hbm [thread:$0]  %s147, 16, %s149, [#allocation5]
    $region29: #{tpu_custom_call.1} parent=1 // pred_fallthru
      _
    // Predicated region
    $region30: #{tpu_custom_call.1} parent=1 // pred_check
      _
    $region31: #{tpu_custom_call.1} parent=1 // pred_check_branch
      %153 = sbr.rel (0) target = $region33
    $region32: #{tpu_custom_call.1} parent=1 // pred_region
      %155 = dma.done [#allocation5], 16
    $region33: #{tpu_custom_call.1} parent=1 // pred_fallthru
      _
    %156 = vsyncpa [#allocation4], 1
    %157 = vsyncpa [#allocation5], 1

</llo_original>
